<compile_context>
chip_gen: v6e
topology: v6e:2x2x1
jax: 0.10.0
libtpu: 0.0.40
codegen_flags: <defaults>
</compile_context>

<pallas_src>
import functools
import math

import jax
import jax.numpy as jnp
import numpy as np
from jax import lax
from jax.experimental import pallas as pl
from jax.experimental.pallas import tpu as pltpu


def mean_pool_conv_kernel(xt_ref, w_ref, b_ref, mask_ref, o_ref, *, k, p, wo, cg):
    """Whole problem in one grid step (channels on sublanes, pixels on lanes).

    xt_ref  : (4*cg, M)       four stride-2 pooling taps, channel group padded to cg
    w_ref   : (Cout, k*k*cg)  conv weight * 0.25, columns ordered (dy, dx, c)
    b_ref   : (Cout, 1)       conv bias
    mask_ref: (k*k, M)        1.0 where tap (dy, dx) lands inside the image, else 0.0
    o_ref   : (Cout, M)       output slab, M = N*Ho*Wo
    """
    xt = xt_ref[...]
    # mean pool = sum of the four taps (the 1/4 is folded into the weights)
    pooled = (xt[0 * cg:1 * cg, :] + xt[1 * cg:2 * cg, :]
              + xt[2 * cg:3 * cg, :] + xt[3 * cg:4 * cg, :])            # (cg, M)

    m = pooled.shape[1]
    twice = jnp.concatenate([pooled, pooled], axis=1)                   # (cg, 2M): circular shifts
    mask = mask_ref[...]                                                # (k*k, M)

    # im2col: one masked, lane-shifted copy of the pooled map per conv tap.
    cols = []
    for dy in range(k):
        for dx in range(k):
            g = dy * k + dx
            off = ((dy - p) * wo + (dx - p)) % m                        # shift in flat (i, j) space
            shifted = pooled if off == 0 else twice[:, off:off + m]     # (cg, M)
            cols.append(shifted * mask[g:g + 1, :])                     # zero out-of-image taps
    lhs = jnp.concatenate(cols, axis=0)                                 # (k*k*cg, M)

    # single MXU matmul for the whole batch, bias in the epilogue
    out = jnp.dot(w_ref[...], lhs, preferred_element_type=jnp.float32)  # (Cout, M)
    o_ref[...] = (out + b_ref[...]).astype(o_ref.dtype)


def mean_pool_conv(x, w, b, *, k):
    """x: (N, Cin, H, W) NCHW; w: (Cout, Cin, k, k) OIHW; b: (Cout,). Returns NCHW."""
    n, cin, h, wdim = x.shape
    cout = w.shape[0]
    assert h % 2 == 0 and wdim % 2 == 0, "H, W must be even (stride-2 mean pool)"
    assert k % 2 == 1, "k must be odd for padding=(k-1)//2 to be symmetric"
    p = (k - 1) // 2
    ho, wo = h // 2, wdim // 2
    m = n * ho * wo
    cg = ((cin + 7) // 8) * 8          # channel group padded to a full 8-sublane tile

    # --- layout glue (one small fused copy): NCHW -> taps/channels on sublanes, pixels on lanes
    x6 = x.reshape(n, cin, ho, 2, wo, 2)                                # (n, c, i, a, j, b)
    taps = jnp.transpose(x6, (3, 5, 1, 0, 2, 4)).reshape(4, cin, m)     # (tap, c, pixel)
    taps = jnp.pad(taps, ((0, 0), (0, cg - cin), (0, 0)))
    xt = taps.reshape(4 * cg, m).astype(jnp.float32)

    # weight: OIHW -> (Cout, k*k*cg) with the 1/4 pooling scale folded in (padded chans = 0)
    w_hwio = jnp.transpose(w, (0, 2, 3, 1))                             # (cout, k, k, cin)
    w_hwio = jnp.pad(w_hwio, ((0, 0), (0, 0), (0, 0), (0, cg - cin)))
    w_mat = (0.25 * w_hwio).reshape(cout, k * k * cg).astype(jnp.float32)
    b2 = b.reshape(cout, 1).astype(jnp.float32)

    # host-precomputed conv-padding mask: mask[dy*k+dx, (n,i,j)] = tap inside the image?
    ii, jj = np.meshgrid(np.arange(ho), np.arange(wo), indexing="ij")
    mask_np = np.zeros((k * k, m), np.float32)
    for dy in range(k):
        for dx in range(k):
            ok = ((ii + dy - p >= 0) & (ii + dy - p < ho)
                  & (jj + dx - p >= 0) & (jj + dx - p < wo))
            mask_np[dy * k + dx] = np.tile(ok.reshape(-1).astype(np.float32), n)
    mask = jnp.asarray(mask_np)

    kernel = functools.partial(mean_pool_conv_kernel, k=k, p=p, wo=wo, cg=cg)
    out_t = pl.pallas_call(
        kernel,
        out_shape=jax.ShapeDtypeStruct((cout, m), jnp.float32),
        grid_spec=pltpu.PrefetchScalarGridSpec(
            num_scalar_prefetch=0,
            grid=(1,),      # whole (tiny) problem in one step: no per-step pipeline overhead
            in_specs=[
                pl.BlockSpec((4 * cg, m), lambda i: (0, 0)),
                pl.BlockSpec((cout, k * k * cg), lambda i: (0, 0)),
                pl.BlockSpec((cout, 1), lambda i: (0, 0)),
                pl.BlockSpec((k * k, m), lambda i: (0, 0)),
            ],
            out_specs=pl.BlockSpec((cout, m), lambda i: (0, 0)),
        ),
        # Single step -> nothing to shard. At production sizes, split M over a leading
        # "parallel" grid axis (v7x megacore) and re-derive tiles against 64 MiB VMEM.
        compiler_params=pltpu.CompilerParams(dimension_semantics=("arbitrary",)),
    )(xt, w_mat, b2, mask)

    # --- layout glue: (Cout, N*Ho*Wo) -> NCHW
    return jnp.transpose(out_t.reshape(cout, n, ho, wo), (1, 0, 2, 3))


def reference(x, w, b, k):
    p = (k - 1) // 2
    pooled = (x[:, :, ::2, ::2] + x[:, :, 1::2, ::2]
              + x[:, :, ::2, 1::2] + x[:, :, 1::2, 1::2]) / 4.0
    out = lax.conv_general_dilated(
        pooled, w, window_strides=(1, 1), padding=[(p, p), (p, p)],
        dimension_numbers=("NCHW", "OIHW", "NCHW"))
    return out + b[None, :, None, None]


if __name__ == "__main__":
    # Module config: MeanPoolConv(n_input=4, n_output=8, k_size=3)
    N, CIN, H, W = 2, 4, 16, 16
    COUT, K = 8, 3

    key = jax.random.PRNGKey(0)
    kx, kw, kb = jax.random.split(key, 3)

    x = jax.random.normal(kx, (N, CIN, H, W), dtype=jnp.float32)

    # Deterministic init mirroring kaiming_uniform_(fan_in, relu) + default bias init.
    fan_in = CIN * K * K
    w_bound = math.sqrt(6.0 / fan_in)
    weight = jax.random.uniform(kw, (COUT, CIN, K, K), jnp.float32, -w_bound, w_bound)
    b_bound = 1.0 / math.sqrt(fan_in)
    bias = jax.random.uniform(kb, (COUT,), jnp.float32, -b_bound, b_bound)

    fwd = jax.jit(functools.partial(mean_pool_conv, k=K))
    out = jax.block_until_ready(fwd(x, weight, bias))

    ref = jax.block_until_ready(reference(x, weight, bias, K))
    assert out.shape == (N, COUT, H // 2, W // 2), out.shape
    np.testing.assert_allclose(np.asarray(out), np.asarray(ref), rtol=1e-4, atol=1e-4)

    print("KERNEL_OK")
</pallas_src>

<mosaic_0001>
module attributes {stable_mosaic.version = 11 : i64} {
  func.func @mean_pool_conv_kernel(%arg0: i32, %arg1: memref<32x128xf32, #tpu.memory_space<vmem>>, %arg2: memref<8x72xf32, #tpu.memory_space<vmem>>, %arg3: memref<8x1xf32, #tpu.memory_space<vmem>>, %arg4: memref<9x128xf32, #tpu.memory_space<vmem>>, %arg5: memref<8x128xf32, #tpu.memory_space<vmem>>) attributes {dimension_semantics = [#tpu.dimension_semantics<arbitrary>], iteration_bounds = array<i64: 1>, scalar_prefetch = 0 : i64, scratch_operands = 0 : i64, tpu.core_type = #tpu.core_type<tc>, window_params = [{pipeline_mode = #tpu.pipeline_mode<synchronous>, transform_indices = @transform_0, window_bounds = array<i64: 32, 128>}, {pipeline_mode = #tpu.pipeline_mode<synchronous>, transform_indices = @transform_1, window_bounds = array<i64: 8, 72>}, {pipeline_mode = #tpu.pipeline_mode<synchronous>, transform_indices = @transform_2, window_bounds = array<i64: 8, 1>}, {pipeline_mode = #tpu.pipeline_mode<synchronous>, transform_indices = @transform_3, window_bounds = array<i64: 9, 128>}, {pipeline_mode = #tpu.pipeline_mode<synchronous>, transform_indices = @transform_4, window_bounds = array<i64: 8, 128>}]} {
    %c0 = arith.constant 0 : index
    %c0_0 = arith.constant 0 : index
    %0 = vector.load %arg1[%c0, %c0_0] : memref<32x128xf32, #tpu.memory_space<vmem>>, vector<32x128xf32>
    %1 = vector.extract_strided_slice %0 {offsets = [0, 0], sizes = [8, 128], strides = [1, 1]} : vector<32x128xf32> to vector<8x128xf32>
    %2 = vector.extract_strided_slice %0 {offsets = [8, 0], sizes = [8, 128], strides = [1, 1]} : vector<32x128xf32> to vector<8x128xf32>
    %3 = arith.addf %1, %2 : vector<8x128xf32>
    %4 = vector.extract_strided_slice %0 {offsets = [16, 0], sizes = [8, 128], strides = [1, 1]} : vector<32x128xf32> to vector<8x128xf32>
    %5 = arith.addf %3, %4 : vector<8x128xf32>
    %6 = vector.extract_strided_slice %0 {offsets = [24, 0], sizes = [8, 128], strides = [1, 1]} : vector<32x128xf32> to vector<8x128xf32>
    %7 = arith.addf %5, %6 : vector<8x128xf32>
    %8 = tpu.concatenate %7, %7 in 1 : vector<8x128xf32>, vector<8x128xf32> -> vector<8x256xf32>
    %c0_1 = arith.constant 0 : index
    %c0_2 = arith.constant 0 : index
    %9 = vector.load %arg4[%c0_1, %c0_2] : memref<9x128xf32, #tpu.memory_space<vmem>>, vector<9x128xf32>
    %10 = vector.extract_strided_slice %8 {offsets = [0, 119], sizes = [8, 128], strides = [1, 1]} : vector<8x256xf32> to vector<8x128xf32>
    %11 = vector.extract_strided_slice %9 {offsets = [0, 0], sizes = [1, 128], strides = [1, 1]} : vector<9x128xf32> to vector<1x128xf32>
    %12 = vector.broadcast %11 : vector<1x128xf32> to vector<8x128xf32>
    %13 = arith.mulf %10, %12 : vector<8x128xf32>
    %14 = vector.extract_strided_slice %8 {offsets = [0, 120], sizes = [8, 128], strides = [1, 1]} : vector<8x256xf32> to vector<8x128xf32>
    %15 = vector.extract_strided_slice %9 {offsets = [1, 0], sizes = [1, 128], strides = [1, 1]} : vector<9x128xf32> to vector<1x128xf32>
    %16 = vector.broadcast %15 : vector<1x128xf32> to vector<8x128xf32>
    %17 = arith.mulf %14, %16 : vector<8x128xf32>
    %18 = vector.extract_strided_slice %8 {offsets = [0, 121], sizes = [8, 128], strides = [1, 1]} : vector<8x256xf32> to vector<8x128xf32>
    %19 = vector.extract_strided_slice %9 {offsets = [2, 0], sizes = [1, 128], strides = [1, 1]} : vector<9x128xf32> to vector<1x128xf32>
    %20 = vector.broadcast %19 : vector<1x128xf32> to vector<8x128xf32>
    %21 = arith.mulf %18, %20 : vector<8x128xf32>
    %22 = vector.extract_strided_slice %8 {offsets = [0, 127], sizes = [8, 128], strides = [1, 1]} : vector<8x256xf32> to vector<8x128xf32>
    %23 = vector.extract_strided_slice %9 {offsets = [3, 0], sizes = [1, 128], strides = [1, 1]} : vector<9x128xf32> to vector<1x128xf32>
    %24 = vector.broadcast %23 : vector<1x128xf32> to vector<8x128xf32>
    %25 = arith.mulf %22, %24 : vector<8x128xf32>
    %26 = vector.extract_strided_slice %9 {offsets = [4, 0], sizes = [1, 128], strides = [1, 1]} : vector<9x128xf32> to vector<1x128xf32>
    %27 = vector.broadcast %26 : vector<1x128xf32> to vector<8x128xf32>
    %28 = arith.mulf %7, %27 : vector<8x128xf32>
    %29 = vector.extract_strided_slice %8 {offsets = [0, 1], sizes = [8, 128], strides = [1, 1]} : vector<8x256xf32> to vector<8x128xf32>
    %30 = vector.extract_strided_slice %9 {offsets = [5, 0], sizes = [1, 128], strides = [1, 1]} : vector<9x128xf32> to vector<1x128xf32>
    %31 = vector.broadcast %30 : vector<1x128xf32> to vector<8x128xf32>
    %32 = arith.mulf %29, %31 : vector<8x128xf32>
    %33 = vector.extract_strided_slice %8 {offsets = [0, 7], sizes = [8, 128], strides = [1, 1]} : vector<8x256xf32> to vector<8x128xf32>
    %34 = vector.extract_strided_slice %9 {offsets = [6, 0], sizes = [1, 128], strides = [1, 1]} : vector<9x128xf32> to vector<1x128xf32>
    %35 = vector.broadcast %34 : vector<1x128xf32> to vector<8x128xf32>
    %36 = arith.mulf %33, %35 : vector<8x128xf32>
    %37 = vector.extract_strided_slice %8 {offsets = [0, 8], sizes = [8, 128], strides = [1, 1]} : vector<8x256xf32> to vector<8x128xf32>
    %38 = vector.extract_strided_slice %9 {offsets = [7, 0], sizes = [1, 128], strides = [1, 1]} : vector<9x128xf32> to vector<1x128xf32>
    %39 = vector.broadcast %38 : vector<1x128xf32> to vector<8x128xf32>
    %40 = arith.mulf %37, %39 : vector<8x128xf32>
    %41 = vector.extract_strided_slice %8 {offsets = [0, 9], sizes = [8, 128], strides = [1, 1]} : vector<8x256xf32> to vector<8x128xf32>
    %42 = vector.extract_strided_slice %9 {offsets = [8, 0], sizes = [1, 128], strides = [1, 1]} : vector<9x128xf32> to vector<1x128xf32>
    %43 = vector.broadcast %42 : vector<1x128xf32> to vector<8x128xf32>
    %44 = arith.mulf %41, %43 : vector<8x128xf32>
    %45 = tpu.concatenate %13, %17, %21, %25, %28, %32, %36, %40, %44 in 0 : vector<8x128xf32>, vector<8x128xf32>, vector<8x128xf32>, vector<8x128xf32>, vector<8x128xf32>, vector<8x128xf32>, vector<8x128xf32>, vector<8x128xf32>, vector<8x128xf32> -> vector<72x128xf32>
    %c0_3 = arith.constant 0 : index
    %c0_4 = arith.constant 0 : index
    %46 = vector.load %arg2[%c0_3, %c0_4] : memref<8x72xf32, #tpu.memory_space<vmem>>, vector<8x72xf32>
    %cst = arith.constant dense<0.000000e+00> : vector<8x128xf32>
    %47 = tpu.matmul %46, %45, %cst {dimension_numbers = #tpu.dot_dimension_numbers<[1], [0], [0], [1], [0, 0, 1, 1], [], []>} : vector<8x72xf32>, vector<72x128xf32>, vector<8x128xf32> -> vector<8x128xf32>
    %c0_5 = arith.constant 0 : index
    %c0_6 = arith.constant 0 : index
    %48 = vector.load %arg3[%c0_5, %c0_6] : memref<8x1xf32, #tpu.memory_space<vmem>>, vector<8x1xf32>
    %49 = vector.broadcast %48 : vector<8x1xf32> to vector<8x128xf32>
    %50 = arith.addf %47, %49 : vector<8x128xf32>
    %c0_7 = arith.constant 0 : index
    %c0_8 = arith.constant 0 : index
    %51 = vector.load %arg5[%c0_7, %c0_8] : memref<8x128xf32, #tpu.memory_space<vmem>>, vector<8x128xf32>
    tpu.vector_store %arg5[%c0_7, %c0_8], %50 {strides = array<i32>} : memref<8x128xf32, #tpu.memory_space<vmem>>, vector<8x128xf32>,
    return
  }
  func.func @transform_0(%arg0: i32) -> (i32, i32) {
    %c0_i32 = arith.constant 0 : i32
    %c0_i32_0 = arith.constant 0 : i32
    %c0_i32_1 = arith.constant 0 : i32
    return %c0_i32, %c0_i32_0 : i32, i32
  }
  func.func @transform_1(%arg0: i32) -> (i32, i32) {
    %c0_i32 = arith.constant 0 : i32
    %c0_i32_0 = arith.constant 0 : i32
    %c0_i32_1 = arith.constant 0 : i32
    return %c0_i32, %c0_i32_0 : i32, i32
  }
  func.func @transform_2(%arg0: i32) -> (i32, i32) {
    %c0_i32 = arith.constant 0 : i32
    %c0_i32_0 = arith.constant 0 : i32
    %c0_i32_1 = arith.constant 0 : i32
    return %c0_i32, %c0_i32_0 : i32, i32
  }
  func.func @transform_3(%arg0: i32) -> (i32, i32) {
    %c0_i32 = arith.constant 0 : i32
    %c0_i32_0 = arith.constant 0 : i32
    %c0_i32_1 = arith.constant 0 : i32
    return %c0_i32, %c0_i32_0 : i32, i32
  }
  func.func @transform_4(%arg0: i32) -> (i32, i32) {
    %c0_i32 = arith.constant 0 : i32
    %c0_i32_0 = arith.constant 0 : i32
    %c0_i32_1 = arith.constant 0 : i32
    return %c0_i32, %c0_i32_0 : i32, i32
  }
}

</mosaic_0001>

<llo_original>
// kernel: mean_pool_conv.1
$region0: #{mean_pool_conv.1}
  #allocation0 [shape = 'u32[]', space=smem, size = 0x4, offset = 0x4, fixed_abs, tag = 'smem constant byte address 0x4 - core index']
  #allocation1 [shape = 'u32[144,128]{1,0:T(1,128)}', space=vmem, size = 0x12000, scoped, tag = 'internal scratch']
  %s0 = inlined_call_operand.vmem [shape: f32[32,128], index: 0, kind: input, shape index: {}]
  %s1 = inlined_call_operand.vmem [shape: f32[8,72], index: 1, kind: input, shape index: {}]
  %s2 = inlined_call_operand.vmem [shape: f32[8,1], index: 2, kind: input, shape index: {}]
  %s3 = inlined_call_operand.vmem [shape: f32[9,128], index: 3, kind: input, shape index: {}]
  %s4 = inlined_call_operand.vmem [shape: f32[8,128], index: 4, kind: output, shape index: {}]
  %s5 = sld [smem:[#allocation0]]
  $region26: #{mean_pool_conv.1} parent=0
    _
  %s7 = ssub.s32 1, %s5
  %s8 = scalar_select 0, %s7, %s5
  // Predicated region
  $region2: #{mean_pool_conv.1} parent=0 // pred_check
    _
  $region3: #{mean_pool_conv.1} parent=0 // pred_check_branch
    %10 = sbr.rel (0) target = $region5
  $region4: #{mean_pool_conv.1} parent=0 // pred_region
    _
  $region5: #{mean_pool_conv.1} parent=0 // pred_fallthru
    _
  // Predicated region
  $region6: #{mean_pool_conv.1} parent=0 // pred_check
    _
  $region7: #{mean_pool_conv.1} parent=0 // pred_check_branch
    %12 = sbr.rel (0) target = $region9
  $region8: #{mean_pool_conv.1} parent=0 // pred_region
    _
  $region9: #{mean_pool_conv.1} parent=0 // pred_fallthru
    _
  // Predicated region
  $region10: #{mean_pool_conv.1} parent=0 // pred_check
    _
  $region11: #{mean_pool_conv.1} parent=0 // pred_check_branch
    %14 = sbr.rel (0) target = $region13
  $region12: #{mean_pool_conv.1} parent=0 // pred_region
    _
  $region13: #{mean_pool_conv.1} parent=0 // pred_fallthru
    _
  // Predicated region
  $region14: #{mean_pool_conv.1} parent=0 // pred_check
    _
  $region15: #{mean_pool_conv.1} parent=0 // pred_check_branch
    %16 = sbr.rel (0) target = $region17
  $region16: #{mean_pool_conv.1} parent=0 // pred_region
    _
  $region17: #{mean_pool_conv.1} parent=0 // pred_fallthru
    _
  %v17 = vld [vmem:[%s0] sm:$0xff]
  %v18 = vld [vmem:[%s0 + $0x8] sm:$0xff]
  %v19 = vld [vmem:[%s0 + $0x10] sm:$0xff]
  %v20 = vld [vmem:[%s0 + $0x18] sm:$0xff]
  %v21 = vadd.f32 %v17, %v18
  %v22 = vadd.f32 %v21, %v19
  %v23 = vadd.f32 %v22, %v20
  %v24 = vld [vmem:[%s3] sm:$0xff]
  %v25 = vld [vmem:[%s3 + $0x8] sm:$0x1]
  %v26 = vlaneseq
  %v27 = vshrl.u32 %v26, 7
  %v28 = vsub.s32 0, %v27
  %v29 = vrot.slane %v24, %v28
  %31 = vrot.lane.b32.xlu0 %v29, 119
  %v32 = vpop.permute.xlu0 %31
  %v34 = vmul.f32 %v23, %v32
  %v35 = vlaneseq
  %v36 = vshrl.u32 %v35, 7
  %v37 = vsub.s32 1, %v36
  %v38 = vrot.slane %v24, %v37
  %40 = vrot.lane.b32.xlu0 %v38, 120
  %v41 = vpop.permute.xlu0 %40
  %v43 = vmul.f32 %v23, %v41
  %v44 = vlaneseq
  %v45 = vshrl.u32 %v44, 7
  %v46 = vsub.s32 2, %v45
  %v47 = vrot.slane %v24, %v46
  %49 = vrot.lane.b32.xlu0 %v47, 121
  %v50 = vpop.permute.xlu0 %49
  %v52 = vmul.f32 %v23, %v50
  %v53 = vlaneseq
  %v54 = vshrl.u32 %v53, 7
  %v55 = vsub.s32 3, %v54
  %v56 = vrot.slane %v24, %v55
  %58 = vrot.lane.b32.xlu0 %v56, 127
  %v59 = vpop.permute.xlu0 %58
  %v61 = vmul.f32 %v23, %v59
  %v62 = vlaneseq
  %v63 = vshrl.u32 %v62, 7
  %v64 = vsub.s32 4, %v63
  %v65 = vrot.slane %v24, %v64
  %v66 = vmul.f32 %v23, %v65
  %v67 = vlaneseq
  %v68 = vshrl.u32 %v67, 7
  %v69 = vsub.s32 5, %v68
  %v70 = vrot.slane %v24, %v69
  %72 = vrot.lane.b32.xlu0 %v70, 1
  %v73 = vpop.permute.xlu0 %72
  %v75 = vmul.f32 %v23, %v73
  %v76 = vlaneseq
  %v77 = vshrl.u32 %v76, 7
  %v78 = vsub.s32 6, %v77
  %v79 = vrot.slane %v24, %v78
  %81 = vrot.lane.b32.xlu0 %v79, 7
  %v82 = vpop.permute.xlu0 %81
  %v84 = vmul.f32 %v23, %v82
  %v85 = vlaneseq
  %v86 = vshrl.u32 %v85, 7
  %v87 = vsub.s32 7, %v86
  %v88 = vrot.slane %v24, %v87
  %90 = vrot.lane.b32.xlu0 %v88, 8
  %v91 = vpop.permute.xlu0 %90
  %v93 = vmul.f32 %v23, %v91
  %v94 = vlaneseq
  %v95 = vshrl.u32 %v94, 7
  %v96 = vsub.s32 0, %v95
  %v97 = vrot.slane %v25, %v96
  %99 = vrot.lane.b32.xlu0 %v97, 9
  %v100 = vpop.permute.xlu0 %99
  %v102 = vmul.f32 %v23, %v100
  %104 = vrot.lane.b32.xlu0 %v43, 127
  %v105 = vpop.permute.xlu0 %104
  %107 = vrot.lane.b32.xlu0 %v52, 126
  %v108 = vpop.permute.xlu0 %107
  %110 = vrot.lane.b32.xlu0 %v61, 120
  %v111 = vpop.permute.xlu0 %110
  %113 = vrot.lane.b32.xlu0 %v66, 119
  %v114 = vpop.permute.xlu0 %113
  %116 = vrot.lane.b32.xlu0 %v75, 118
  %v117 = vpop.permute.xlu0 %116
  %119 = vrot.lane.b32.xlu0 %v84, 112
  %v120 = vpop.permute.xlu0 %119
  %122 = vrot.lane.b32.xlu0 %v93, 111
  %v123 = vpop.permute.xlu0 %122
  %125 = vrot.lane.b32.xlu0 %v102, 110
  %v126 = vpop.permute.xlu0 %125
  %v127 = vld [vmem:[%s1] sm:$0xff]
  %v128 = vld [vmem:[%s2] sm:$0xff]
  %130 = vset.pattern.permute.xlu0 0
  %131 = vperm.xlu0 %130, %v128
  %v132 = vpop.permute.xlu0 %131
  %135 = vrot.lane.b32.xlu0 %v34, 9
  %v136 = vpop.permute.xlu0 %135
  %137 = vrot.lane.b32.xlu0 %v105, 9
  %v138 = vpop.permute.xlu0 %137
  %139 = vrot.lane.b32.xlu0 %v108, 9
  %v140 = vpop.permute.xlu0 %139
  %141 = vrot.lane.b32.xlu0 %v111, 9
  %v142 = vpop.permute.xlu0 %141
  %143 = vrot.lane.b32.xlu0 %v114, 9
  %v144 = vpop.permute.xlu0 %143
  %145 = vrot.lane.b32.xlu0 %v117, 9
  %v146 = vpop.permute.xlu0 %145
  %147 = vrot.lane.b32.xlu0 %v120, 9
  %v148 = vpop.permute.xlu0 %147
  %149 = vrot.lane.b32.xlu0 %v123, 9
  %v150 = vpop.permute.xlu0 %149
  %151 = vrot.lane.b32.xlu0 %v126, 9
  %v152 = vpop.permute.xlu0 %151
  %vm153 = vcmask 72704
  %v154 = vsel %vm153, %v138, %v138
  %v155 = vsel %vm153, %v140, %v140
  %v156 = vsel %vm153, %v142, %v142
  %v157 = vsel %vm153, %v146, %v146
  %v158 = vsel %vm153, %v148, %v148
  %v159 = vsel %vm153, %v150, %v150
  %v160 = vsel %vm153, %v152, %v152
  %vm170 = vcmask 588800
  %v172 = vsel %vm170, %v127, 0
  %174 = vmatprep.subr.mxu0 0.0
  %175 = vmatpush1.msra.mxu0 0.0
  %176 = vmatprep.subr.mxu0 0.0
  %177 = vmatpush1.msra.mxu0 0.0
  %178 = vmatprep.subr.mxu0 0.0
  %179 = vmatpush1.msra.mxu0 0.0
  %180 = vmatprep.subr.mxu0 0.0
  %181 = vmatpush1.msra.mxu0 0.0
  %182 = vmatprep.subr.mxu0 0.0
  %183 = vmatpush1.msra.mxu0 0.0
  %184 = vmatprep.subr.mxu0 0.0
  %185 = vmatpush1.msra.mxu0 0.0
  %186 = vmatprep.subr.mxu0 0.0
  %187 = vmatpush1.msra.mxu0 0.0
  %188 = vmatprep.subr.mxu0 0.0
  %189 = vmatpush1.msra.mxu0 %v160
  %190 = vmatprep.subr.mxu0 0.0
  %191 = vmatpush1.msra.mxu0 %v159
  %192 = vmatprep.subr.mxu0 0.0
  %193 = vmatpush1.msra.mxu0 %v158
  %194 = vmatprep.subr.mxu0 0.0
  %195 = vmatpush1.msra.mxu0 %v157
  %196 = vmatprep.subr.mxu0 0.0
  %197 = vmatpush1.msra.mxu0 %v144
  %198 = vmatprep.subr.mxu0 0.0
  %199 = vmatpush1.msra.mxu0 %v156
  %200 = vmatprep.subr.mxu0 0.0
  %201 = vmatpush1.msra.mxu0 %v155
  %202 = vmatprep.subr.mxu0 0.0
  %203 = vmatpush1.msra.mxu0 %v154
  %204 = vmatprep.subr.mxu0 0.0
  %205 = vmatpush1.msra.mxu0 %v136
  %206 = vmatprep.subr.mxu0 0.0
  %207 = vmatpush2.msra.mxu0 0.0
  %208 = vmatprep.subr.mxu0 0.0
  %209 = vmatpush2.msra.mxu0 0.0
  %210 = vmatprep.subr.mxu0 0.0
  %211 = vmatpush2.msra.mxu0 0.0
  %212 = vmatprep.subr.mxu0 0.0
  %213 = vmatpush2.msra.mxu0 0.0
  %214 = vmatprep.subr.mxu0 0.0
  %215 = vmatpush2.msra.mxu0 0.0
  %216 = vmatprep.subr.mxu0 0.0
  %217 = vmatpush2.msra.mxu0 0.0
  %218 = vmatprep.subr.mxu0 0.0
  %219 = vmatpush2.msra.mxu0 0.0
  %220 = vmatprep.subr.mxu0 0.0
  %221 = vmatpush2.msra.mxu0 0.0
  %222 = vmatprep.subr.mxu0 0.0
  %223 = vmatpush2.msra.mxu0 0.0
  %224 = vmatprep.subr.mxu0 0.0
  %225 = vmatpush2.msra.mxu0 0.0
  %226 = vmatprep.subr.mxu0 0.0
  %227 = vmatpush2.msra.mxu0 0.0
  %228 = vmatprep.subr.mxu0 0.0
  %229 = vmatpush2.msra.mxu0 0.0
  %230 = vmatprep.subr.mxu0 0.0
  %231 = vmatpush2.msra.mxu0 0.0
  %232 = vmatprep.subr.mxu0 0.0
  %233 = vmatpush2.msra.mxu0 0.0
  %234 = vmatprep.subr.mxu0 0.0
  %235 = vmatpush2.msra.mxu0 0.0
  %236 = vmatprep.subr.mxu0 0.0
  %237 = vmatpush2.msra.mxu0 0.0
  %238 = vmatprep.mubr.f32.mxu0 0.0
  %239 = vmatmul.mubr.f32.gmra.mxu0 %v172
  %v240 = vpop.f32.mrf.mxu0
  %v241 = vadd.f32 %v132, %v240
  %v242 = vpop.f32.mrf.mxu0
  %243 = vdwg.mxu0
  %244 = vst [vmem:[%s4] sm:$0xff] %v241
  // Predicated region
  $region18: #{mean_pool_conv.1} parent=0 // pred_check
    _
  $region19: #{mean_pool_conv.1} parent=0 // pred_check_branch
    %246 = sbr.rel (0) target = $region21
  $region20: #{mean_pool_conv.1} parent=0 // pred_region
    _
  $region21: #{mean_pool_conv.1} parent=0 // pred_fallthru
    _
  // Predicated region
  $region22: #{mean_pool_conv.1} parent=0 // pred_check
    _
  $region23: #{mean_pool_conv.1} parent=0 // pred_check_branch
    %248 = sbr.rel (0) target = $region25
  $region24: #{mean_pool_conv.1} parent=0 // pred_region
    _
  $region25: #{mean_pool_conv.1} parent=0 // pred_fallthru
    _

</llo_original>
